<compile_context>
chip_gen: v5e
topology: v5e:2x2
jax: 0.10.0
libtpu: 0.0.40
codegen_flags: <defaults>
</compile_context>

<pallas_src>
import functools
import math

import jax
import jax.numpy as jnp
from jax.experimental import pallas as pl
from jax.experimental.pallas import tpu as pltpu


def mha_kernel(q_ref, k_ref, v_ref,
               wq_ref, bq_ref, wk_ref, bk_ref, wv_ref, bv_ref,
               wo_ref, bo_ref, o_ref, ctx_ref, *,
               heads, scale, compute_dtype):
    f32 = jnp.float32
    Dm = q_ref.shape[2]
    dk = Dm // heads

    q = q_ref[0].astype(compute_dtype)          # (Sq, Dm)
    k = k_ref[0].astype(compute_dtype)          # (S,  Dm)
    v = v_ref[0].astype(compute_dtype)          # (S,  Dm)

    # Fused full-width projections (all heads at once), fp32 accumulate.
    qh_all = (jnp.dot(q, wq_ref[...].astype(compute_dtype),
                      preferred_element_type=f32) + bq_ref[...]).astype(compute_dtype)
    kh_all = (jnp.dot(k, wk_ref[...].astype(compute_dtype),
                      preferred_element_type=f32) + bk_ref[...]).astype(compute_dtype)
    vh_all = (jnp.dot(v, wv_ref[...].astype(compute_dtype),
                      preferred_element_type=f32) + bv_ref[...]).astype(compute_dtype)

    # Per-head attention (static unroll over heads).  Contexts land in an
    # fp32 VMEM scratch at their per-head lane slice so the output projection
    # can be one Dm-wide matmul.
    for h in range(heads):
        sl = slice(h * dk, (h + 1) * dk)
        qh = qh_all[:, sl]                       # (Sq, dk)
        kh = kh_all[:, sl]                       # (S,  dk)
        vh = vh_all[:, sl]                       # (S,  dk)

        # NT matmul: contract over dk without materializing kh.T.
        scores = jax.lax.dot_general(
            qh, kh, (((1,), (1,)), ((), ())),
            preferred_element_type=f32) * scale  # (Sq, S)

        # Softmax over the key axis (fp32), EUP approx reciprocal for denom.
        m = jnp.max(scores, axis=-1, keepdims=True)
        p = jnp.exp(scores - m)
        attn = p * pl.reciprocal(jnp.sum(p, axis=-1, keepdims=True), approx=True)

        # Dropout is identity at inference time.
        ctx_ref[:, sl] = jnp.dot(attn.astype(compute_dtype), vh,
                                 preferred_element_type=f32)   # (Sq, dk)

    # Single fused output projection across all heads.
    out = jnp.dot(ctx_ref[...].astype(compute_dtype),
                  wo_ref[...].astype(compute_dtype),
                  preferred_element_type=f32) + bo_ref[...]
    o_ref[0] = out.astype(o_ref.dtype)


def multi_head_attention(query, key, value, params, *, heads,
                         compute_dtype=jnp.bfloat16):
    """query/key/value: (S, B, d_model) float32.  Returns (S, B, d_model)."""
    S, B, Dm = query.shape
    dk = Dm // heads
    scale = 1.0 / math.sqrt(dk)

    # (B, S, Dm) for the kernel.
    qb = jnp.transpose(query, (1, 0, 2))
    kb = jnp.transpose(key, (1, 0, 2))
    vb = jnp.transpose(value, (1, 0, 2))

    # Query-tile size: largest of {512, 256, 128} dividing S, else full S.
    Sq = S
    for cand in (512, 256, 128):
        if S % cand == 0:
            Sq = cand
            break
    n_q = S // Sq

    # Weights in "math" orientation: W has shape (in, out); heads are
    # contiguous dk-wide column groups (same ordering as nn.Linear).
    wq, wk, wv, wo = params["wq"], params["wk"], params["wv"], params["wo"]
    bq = params["bq"].reshape(1, Dm)
    bk = params["bk"].reshape(1, Dm)
    bv = params["bv"].reshape(1, Dm)
    bo = params["bo"].reshape(1, Dm)

    q_spec = pl.BlockSpec((1, Sq, Dm), lambda b, qi: (b, qi, 0))
    kv_spec = pl.BlockSpec((1, S, Dm), lambda b, qi: (b, 0, 0))
    # Constant index_maps -> weights/biases stay resident in VMEM for the grid.
    w_spec = pl.BlockSpec((Dm, Dm), lambda b, qi: (0, 0))
    bias_spec = pl.BlockSpec((1, Dm), lambda b, qi: (0, 0))

    flops = 8 * B * S * Dm * Dm + 4 * B * S * S * Dm
    transcendentals = B * heads * S * S
    bytes_accessed = 4 * (4 * B * S * Dm + 4 * Dm * Dm + 4 * Dm)

    out = pl.pallas_call(
        functools.partial(mha_kernel, heads=heads, scale=scale,
                          compute_dtype=compute_dtype),
        out_shape=jax.ShapeDtypeStruct((B, S, Dm), jnp.float32),
        grid=(B, n_q),
        in_specs=[
            q_spec, kv_spec, kv_spec,
            w_spec, bias_spec,          # wq, bq
            w_spec, bias_spec,          # wk, bk
            w_spec, bias_spec,          # wv, bv
            w_spec, bias_spec,          # wo, bo
        ],
        out_specs=pl.BlockSpec((1, Sq, Dm), lambda b, qi: (b, qi, 0)),
        scratch_shapes=[pltpu.VMEM((Sq, Dm), jnp.float32)],
        compiler_params=pltpu.CompilerParams(
            dimension_semantics=("parallel", "parallel"),
            vmem_limit_bytes=48 * 1024 * 1024),   # fits v7x's 64 MiB with headroom
        cost_estimate=pl.CostEstimate(flops=flops,
                                      transcendentals=transcendentals,
                                      bytes_accessed=bytes_accessed),
    )(qb, kb, vb, wq, bq, wk, bk, wv, bv, wo, bo)

    return jnp.transpose(out, (1, 0, 2))


def reference_mha(query, key, value, params, *, heads):
    """Pure-JAX reference mirroring the PyTorch forward (no dropout, no mask)."""
    S, B, Dm = query.shape
    dk = Dm // heads
    scale = 1.0 / math.sqrt(dk)

    def proj(x, w, b):
        y = x @ w + b                       # (S, B, H*dk)
        return y.reshape(S, B, heads, dk)

    q = proj(query, params["wq"], params["bq"])
    k = proj(key, params["wk"], params["bk"])
    v = proj(value, params["wv"], params["bv"])

    scores = jnp.einsum("ibhd,jbhd->ijbh", q, k) * scale
    attn = jax.nn.softmax(scores, axis=1)
    x = jnp.einsum("ijbh,jbhd->ibhd", attn, v).reshape(S, B, Dm)
    return x @ params["wo"] + params["bo"]


def init_params(key, d_model, heads):
    dk = d_model // heads
    ks = jax.random.split(key, 8)
    s = 0.05
    return {
        "wq": s * jax.random.normal(ks[0], (d_model, heads * dk), jnp.float32),
        "bq": s * jax.random.normal(ks[1], (heads * dk,), jnp.float32),
        "wk": s * jax.random.normal(ks[2], (d_model, heads * dk), jnp.float32),
        "bk": s * jax.random.normal(ks[3], (heads * dk,), jnp.float32),
        "wv": s * jax.random.normal(ks[4], (d_model, heads * dk), jnp.float32),
        "bv": s * jax.random.normal(ks[5], (heads * dk,), jnp.float32),
        "wo": s * jax.random.normal(ks[6], (d_model, d_model), jnp.float32),
        "bo": s * jax.random.normal(ks[7], (d_model,), jnp.float32),
    }


if __name__ == "__main__":
    SEQ, BATCH, D_MODEL, HEADS = 8, 2, 32, 4

    root = jax.random.PRNGKey(0)
    kq, kk, kv, kp = jax.random.split(root, 4)
    query = jax.random.normal(kq, (SEQ, BATCH, D_MODEL), jnp.float32)
    key = jax.random.normal(kk, (SEQ, BATCH, D_MODEL), jnp.float32)
    value = jax.random.normal(kv, (SEQ, BATCH, D_MODEL), jnp.float32)
    params = init_params(kp, D_MODEL, HEADS)

    ref = reference_mha(query, key, value, params, heads=HEADS)

    # fp32 compute path: tight check against the fp32 reference.
    out_f32 = multi_head_attention(query, key, value, params, heads=HEADS,
                                   compute_dtype=jnp.float32)
    out_f32 = jax.block_until_ready(out_f32)
    assert out_f32.shape == (SEQ, BATCH, D_MODEL)
    assert jnp.allclose(out_f32, ref, atol=2e-3, rtol=2e-3), "fp32 path mismatch"

    # bf16 MXU-operand path (default, per v6e/v7x guidance): looser tolerance.
    out_bf16 = multi_head_attention(query, key, value, params, heads=HEADS,
                                    compute_dtype=jnp.bfloat16)
    out_bf16 = jax.block_until_ready(out_bf16)
    assert out_bf16.shape == (SEQ, BATCH, D_MODEL)
    assert jnp.allclose(out_bf16, ref, atol=2e-2, rtol=2e-2), "bf16 path mismatch"

    print("KERNEL_OK")
</pallas_src>

<mosaic_0001>
module attributes {stable_mosaic.version = 11 : i64} {
  func.func @mha_kernel(%arg0: i32, %arg1: i32, %arg2: memref<1x8x32xf32, #tpu.memory_space<vmem>>, %arg3: memref<1x8x32xf32, #tpu.memory_space<vmem>>, %arg4: memref<1x8x32xf32, #tpu.memory_space<vmem>>, %arg5: memref<32x32xf32, #tpu.memory_space<vmem>>, %arg6: memref<1x32xf32, #tpu.memory_space<vmem>>, %arg7: memref<32x32xf32, #tpu.memory_space<vmem>>, %arg8: memref<1x32xf32, #tpu.memory_space<vmem>>, %arg9: memref<32x32xf32, #tpu.memory_space<vmem>>, %arg10: memref<1x32xf32, #tpu.memory_space<vmem>>, %arg11: memref<32x32xf32, #tpu.memory_space<vmem>>, %arg12: memref<1x32xf32, #tpu.memory_space<vmem>>, %arg13: memref<1x8x32xf32, #tpu.memory_space<vmem>>, %arg14: memref<8x32xf32, #tpu.memory_space<vmem>>) attributes {dimension_semantics = [#tpu.dimension_semantics<parallel>, #tpu.dimension_semantics<parallel>], iteration_bounds = array<i64: 2, 1>, scalar_prefetch = 0 : i64, scratch_operands = 1 : i64, tpu.core_type = #tpu.core_type<tc>, window_params = [{transform_indices = @transform_0, window_bounds = array<i64: 1, 8, 32>}, {transform_indices = @transform_1, window_bounds = array<i64: 1, 8, 32>}, {transform_indices = @transform_2, window_bounds = array<i64: 1, 8, 32>}, {pipeline_mode = #tpu.pipeline_mode<synchronous>, transform_indices = @transform_3, window_bounds = array<i64: 32, 32>}, {pipeline_mode = #tpu.pipeline_mode<synchronous>, transform_indices = @transform_4, window_bounds = array<i64: 1, 32>}, {pipeline_mode = #tpu.pipeline_mode<synchronous>, transform_indices = @transform_5, window_bounds = array<i64: 32, 32>}, {pipeline_mode = #tpu.pipeline_mode<synchronous>, transform_indices = @transform_6, window_bounds = array<i64: 1, 32>}, {pipeline_mode = #tpu.pipeline_mode<synchronous>, transform_indices = @transform_7, window_bounds = array<i64: 32, 32>}, {pipeline_mode = #tpu.pipeline_mode<synchronous>, transform_indices = @transform_8, window_bounds = array<i64: 1, 32>}, {pipeline_mode = #tpu.pipeline_mode<synchronous>, transform_indices = @transform_9, window_bounds = array<i64: 32, 32>}, {pipeline_mode = #tpu.pipeline_mode<synchronous>, transform_indices = @transform_10, window_bounds = array<i64: 1, 32>}, {transform_indices = @transform_11, window_bounds = array<i64: 1, 8, 32>}]} {
    %c0 = arith.constant 0 : index
    %c0_0 = arith.constant 0 : index
    %c0_1 = arith.constant 0 : index
    %0 = vector.load %arg2[%c0, %c0_0, %c0_1] : memref<1x8x32xf32, #tpu.memory_space<vmem>>, vector<1x8x32xf32>
    %1 = vector.shape_cast %0 : vector<1x8x32xf32> to vector<8x32xf32>
    %c0_2 = arith.constant 0 : index
    %c0_3 = arith.constant 0 : index
    %c0_4 = arith.constant 0 : index
    %2 = vector.load %arg3[%c0_2, %c0_3, %c0_4] : memref<1x8x32xf32, #tpu.memory_space<vmem>>, vector<1x8x32xf32>
    %3 = vector.shape_cast %2 : vector<1x8x32xf32> to vector<8x32xf32>
    %c0_5 = arith.constant 0 : index
    %c0_6 = arith.constant 0 : index
    %c0_7 = arith.constant 0 : index
    %4 = vector.load %arg4[%c0_5, %c0_6, %c0_7] : memref<1x8x32xf32, #tpu.memory_space<vmem>>, vector<1x8x32xf32>
    %5 = vector.shape_cast %4 : vector<1x8x32xf32> to vector<8x32xf32>
    %c0_8 = arith.constant 0 : index
    %c0_9 = arith.constant 0 : index
    %6 = vector.load %arg5[%c0_8, %c0_9] : memref<32x32xf32, #tpu.memory_space<vmem>>, vector<32x32xf32>
    %cst = arith.constant dense<0.000000e+00> : vector<8x32xf32>
    %7 = tpu.matmul %1, %6, %cst {dimension_numbers = #tpu.dot_dimension_numbers<[1], [0], [0], [1], [0, 0, 1, 1], [], []>} : vector<8x32xf32>, vector<32x32xf32>, vector<8x32xf32> -> vector<8x32xf32>
    %c0_10 = arith.constant 0 : index
    %c0_11 = arith.constant 0 : index
    %8 = vector.load %arg6[%c0_10, %c0_11] : memref<1x32xf32, #tpu.memory_space<vmem>>, vector<1x32xf32>
    %9 = vector.broadcast %8 : vector<1x32xf32> to vector<8x32xf32>
    %10 = arith.addf %7, %9 : vector<8x32xf32>
    %c0_12 = arith.constant 0 : index
    %c0_13 = arith.constant 0 : index
    %11 = vector.load %arg7[%c0_12, %c0_13] : memref<32x32xf32, #tpu.memory_space<vmem>>, vector<32x32xf32>
    %cst_14 = arith.constant dense<0.000000e+00> : vector<8x32xf32>
    %12 = tpu.matmul %3, %11, %cst_14 {dimension_numbers = #tpu.dot_dimension_numbers<[1], [0], [0], [1], [0, 0, 1, 1], [], []>} : vector<8x32xf32>, vector<32x32xf32>, vector<8x32xf32> -> vector<8x32xf32>
    %c0_15 = arith.constant 0 : index
    %c0_16 = arith.constant 0 : index
    %13 = vector.load %arg8[%c0_15, %c0_16] : memref<1x32xf32, #tpu.memory_space<vmem>>, vector<1x32xf32>
    %14 = vector.broadcast %13 : vector<1x32xf32> to vector<8x32xf32>
    %15 = arith.addf %12, %14 : vector<8x32xf32>
    %c0_17 = arith.constant 0 : index
    %c0_18 = arith.constant 0 : index
    %16 = vector.load %arg9[%c0_17, %c0_18] : memref<32x32xf32, #tpu.memory_space<vmem>>, vector<32x32xf32>
    %cst_19 = arith.constant dense<0.000000e+00> : vector<8x32xf32>
    %17 = tpu.matmul %5, %16, %cst_19 {dimension_numbers = #tpu.dot_dimension_numbers<[1], [0], [0], [1], [0, 0, 1, 1], [], []>} : vector<8x32xf32>, vector<32x32xf32>, vector<8x32xf32> -> vector<8x32xf32>
    %c0_20 = arith.constant 0 : index
    %c0_21 = arith.constant 0 : index
    %18 = vector.load %arg10[%c0_20, %c0_21] : memref<1x32xf32, #tpu.memory_space<vmem>>, vector<1x32xf32>
    %19 = vector.broadcast %18 : vector<1x32xf32> to vector<8x32xf32>
    %20 = arith.addf %17, %19 : vector<8x32xf32>
    %21 = vector.extract_strided_slice %10 {offsets = [0, 0], sizes = [8, 8], strides = [1, 1]} : vector<8x32xf32> to vector<8x8xf32>
    %22 = vector.extract_strided_slice %15 {offsets = [0, 0], sizes = [8, 8], strides = [1, 1]} : vector<8x32xf32> to vector<8x8xf32>
    %23 = vector.extract_strided_slice %20 {offsets = [0, 0], sizes = [8, 8], strides = [1, 1]} : vector<8x32xf32> to vector<8x8xf32>
    %cst_22 = arith.constant dense<0.000000e+00> : vector<8x8xf32>
    %24 = tpu.matmul %21, %22, %cst_22 {dimension_numbers = #tpu.dot_dimension_numbers<[1], [1], [0], [0], [0, 0, 1, 0], [], []>} : vector<8x8xf32>, vector<8x8xf32>, vector<8x8xf32> -> vector<8x8xf32>
    %cst_23 = arith.constant 0.353553385 : f32
    %25 = vector.broadcast %cst_23 : f32 to vector<8x8xf32>
    %26 = arith.mulf %24, %25 : vector<8x8xf32>
    %cst_24 = arith.constant dense<0xFF800000> : vector<8xf32>
    %27 = vector.multi_reduction <maximumf>, %26, %cst_24 [1] : vector<8x8xf32> to vector<8xf32>
    %28 = vector.shape_cast %27 : vector<8xf32> to vector<8x1xf32>
    %29 = vector.broadcast %28 : vector<8x1xf32> to vector<8x8xf32>
    %30 = arith.subf %26, %29 : vector<8x8xf32>
    %31 = math.exp %30 : vector<8x8xf32>
    %cst_25 = arith.constant dense<0.000000e+00> : vector<8xf32>
    %32 = vector.multi_reduction <add>, %31, %cst_25 [1] : vector<8x8xf32> to vector<8xf32>
    %33 = vector.shape_cast %32 : vector<8xf32> to vector<8x1xf32>
    %34 = tpu.reciprocal %33 {approx = true} : vector<8x1xf32> -> vector<8x1xf32>
    %35 = vector.broadcast %34 : vector<8x1xf32> to vector<8x8xf32>
    %36 = arith.mulf %31, %35 : vector<8x8xf32>
    %cst_26 = arith.constant dense<0.000000e+00> : vector<8x8xf32>
    %37 = tpu.matmul %36, %23, %cst_26 {dimension_numbers = #tpu.dot_dimension_numbers<[1], [0], [0], [1], [0, 0, 1, 1], [], []>} : vector<8x8xf32>, vector<8x8xf32>, vector<8x8xf32> -> vector<8x8xf32>
    %c0_27 = arith.constant 0 : index
    %c0_28 = arith.constant 0 : index
    %38 = vector.load %arg14[%c0_27, %c0_28] : memref<8x32xf32, #tpu.memory_space<vmem>>, vector<8x8xf32>
    tpu.vector_store %arg14[%c0_27, %c0_28], %37 {strides = array<i32>} : memref<8x32xf32, #tpu.memory_space<vmem>>, vector<8x8xf32>,
    %39 = vector.extract_strided_slice %10 {offsets = [0, 8], sizes = [8, 8], strides = [1, 1]} : vector<8x32xf32> to vector<8x8xf32>
    %40 = vector.extract_strided_slice %15 {offsets = [0, 8], sizes = [8, 8], strides = [1, 1]} : vector<8x32xf32> to vector<8x8xf32>
    %41 = vector.extract_strided_slice %20 {offsets = [0, 8], sizes = [8, 8], strides = [1, 1]} : vector<8x32xf32> to vector<8x8xf32>
    %cst_29 = arith.constant dense<0.000000e+00> : vector<8x8xf32>
    %42 = tpu.matmul %39, %40, %cst_29 {dimension_numbers = #tpu.dot_dimension_numbers<[1], [1], [0], [0], [0, 0, 1, 0], [], []>} : vector<8x8xf32>, vector<8x8xf32>, vector<8x8xf32> -> vector<8x8xf32>
    %cst_30 = arith.constant 0.353553385 : f32
    %43 = vector.broadcast %cst_30 : f32 to vector<8x8xf32>
    %44 = arith.mulf %42, %43 : vector<8x8xf32>
    %cst_31 = arith.constant dense<0xFF800000> : vector<8xf32>
    %45 = vector.multi_reduction <maximumf>, %44, %cst_31 [1] : vector<8x8xf32> to vector<8xf32>
    %46 = vector.shape_cast %45 : vector<8xf32> to vector<8x1xf32>
    %47 = vector.broadcast %46 : vector<8x1xf32> to vector<8x8xf32>
    %48 = arith.subf %44, %47 : vector<8x8xf32>
    %49 = math.exp %48 : vector<8x8xf32>
    %cst_32 = arith.constant dense<0.000000e+00> : vector<8xf32>
    %50 = vector.multi_reduction <add>, %49, %cst_32 [1] : vector<8x8xf32> to vector<8xf32>
    %51 = vector.shape_cast %50 : vector<8xf32> to vector<8x1xf32>
    %52 = tpu.reciprocal %51 {approx = true} : vector<8x1xf32> -> vector<8x1xf32>
    %53 = vector.broadcast %52 : vector<8x1xf32> to vector<8x8xf32>
    %54 = arith.mulf %49, %53 : vector<8x8xf32>
    %cst_33 = arith.constant dense<0.000000e+00> : vector<8x8xf32>
    %55 = tpu.matmul %54, %41, %cst_33 {dimension_numbers = #tpu.dot_dimension_numbers<[1], [0], [0], [1], [0, 0, 1, 1], [], []>} : vector<8x8xf32>, vector<8x8xf32>, vector<8x8xf32> -> vector<8x8xf32>
    %c0_34 = arith.constant 0 : index
    %c8 = arith.constant 8 : index
    %56 = vector.load %arg14[%c0_34, %c8] : memref<8x32xf32, #tpu.memory_space<vmem>>, vector<8x8xf32>
    tpu.vector_store %arg14[%c0_34, %c8], %55 {strides = array<i32>} : memref<8x32xf32, #tpu.memory_space<vmem>>, vector<8x8xf32>,
    %57 = vector.extract_strided_slice %10 {offsets = [0, 16], sizes = [8, 8], strides = [1, 1]} : vector<8x32xf32> to vector<8x8xf32>
    %58 = vector.extract_strided_slice %15 {offsets = [0, 16], sizes = [8, 8], strides = [1, 1]} : vector<8x32xf32> to vector<8x8xf32>
    %59 = vector.extract_strided_slice %20 {offsets = [0, 16], sizes = [8, 8], strides = [1, 1]} : vector<8x32xf32> to vector<8x8xf32>
    %cst_35 = arith.constant dense<0.000000e+00> : vector<8x8xf32>
    %60 = tpu.matmul %57, %58, %cst_35 {dimension_numbers = #tpu.dot_dimension_numbers<[1], [1], [0], [0], [0, 0, 1, 0], [], []>} : vector<8x8xf32>, vector<8x8xf32>, vector<8x8xf32> -> vector<8x8xf32>
    %cst_36 = arith.constant 0.353553385 : f32
    %61 = vector.broadcast %cst_36 : f32 to vector<8x8xf32>
    %62 = arith.mulf %60, %61 : vector<8x8xf32>
    %cst_37 = arith.constant dense<0xFF800000> : vector<8xf32>
    %63 = vector.multi_reduction <maximumf>, %62, %cst_37 [1] : vector<8x8xf32> to vector<8xf32>
    %64 = vector.shape_cast %63 : vector<8xf32> to vector<8x1xf32>
    %65 = vector.broadcast %64 : vector<8x1xf32> to vector<8x8xf32>
    %66 = arith.subf %62, %65 : vector<8x8xf32>
    %67 = math.exp %66 : vector<8x8xf32>
    %cst_38 = arith.constant dense<0.000000e+00> : vector<8xf32>
    %68 = vector.multi_reduction <add>, %67, %cst_38 [1] : vector<8x8xf32> to vector<8xf32>
    %69 = vector.shape_cast %68 : vector<8xf32> to vector<8x1xf32>
    %70 = tpu.reciprocal %69 {approx = true} : vector<8x1xf32> -> vector<8x1xf32>
    %71 = vector.broadcast %70 : vector<8x1xf32> to vector<8x8xf32>
    %72 = arith.mulf %67, %71 : vector<8x8xf32>
    %cst_39 = arith.constant dense<0.000000e+00> : vector<8x8xf32>
    %73 = tpu.matmul %72, %59, %cst_39 {dimension_numbers = #tpu.dot_dimension_numbers<[1], [0], [0], [1], [0, 0, 1, 1], [], []>} : vector<8x8xf32>, vector<8x8xf32>, vector<8x8xf32> -> vector<8x8xf32>
    %c0_40 = arith.constant 0 : index
    %c16 = arith.constant 16 : index
    %74 = vector.load %arg14[%c0_40, %c16] : memref<8x32xf32, #tpu.memory_space<vmem>>, vector<8x8xf32>
    tpu.vector_store %arg14[%c0_40, %c16], %73 {strides = array<i32>} : memref<8x32xf32, #tpu.memory_space<vmem>>, vector<8x8xf32>,
    %75 = vector.extract_strided_slice %10 {offsets = [0, 24], sizes = [8, 8], strides = [1, 1]} : vector<8x32xf32> to vector<8x8xf32>
    %76 = vector.extract_strided_slice %15 {offsets = [0, 24], sizes = [8, 8], strides = [1, 1]} : vector<8x32xf32> to vector<8x8xf32>
    %77 = vector.extract_strided_slice %20 {offsets = [0, 24], sizes = [8, 8], strides = [1, 1]} : vector<8x32xf32> to vector<8x8xf32>
    %cst_41 = arith.constant dense<0.000000e+00> : vector<8x8xf32>
    %78 = tpu.matmul %75, %76, %cst_41 {dimension_numbers = #tpu.dot_dimension_numbers<[1], [1], [0], [0], [0, 0, 1, 0], [], []>} : vector<8x8xf32>, vector<8x8xf32>, vector<8x8xf32> -> vector<8x8xf32>
    %cst_42 = arith.constant 0.353553385 : f32
    %79 = vector.broadcast %cst_42 : f32 to vector<8x8xf32>
    %80 = arith.mulf %78, %79 : vector<8x8xf32>
    %cst_43 = arith.constant dense<0xFF800000> : vector<8xf32>
    %81 = vector.multi_reduction <maximumf>, %80, %cst_43 [1] : vector<8x8xf32> to vector<8xf32>
    %82 = vector.shape_cast %81 : vector<8xf32> to vector<8x1xf32>
    %83 = vector.broadcast %82 : vector<8x1xf32> to vector<8x8xf32>
    %84 = arith.subf %80, %83 : vector<8x8xf32>
    %85 = math.exp %84 : vector<8x8xf32>
    %cst_44 = arith.constant dense<0.000000e+00> : vector<8xf32>
    %86 = vector.multi_reduction <add>, %85, %cst_44 [1] : vector<8x8xf32> to vector<8xf32>
    %87 = vector.shape_cast %86 : vector<8xf32> to vector<8x1xf32>
    %88 = tpu.reciprocal %87 {approx = true} : vector<8x1xf32> -> vector<8x1xf32>
    %89 = vector.broadcast %88 : vector<8x1xf32> to vector<8x8xf32>
    %90 = arith.mulf %85, %89 : vector<8x8xf32>
    %cst_45 = arith.constant dense<0.000000e+00> : vector<8x8xf32>
    %91 = tpu.matmul %90, %77, %cst_45 {dimension_numbers = #tpu.dot_dimension_numbers<[1], [0], [0], [1], [0, 0, 1, 1], [], []>} : vector<8x8xf32>, vector<8x8xf32>, vector<8x8xf32> -> vector<8x8xf32>
    %c0_46 = arith.constant 0 : index
    %c24 = arith.constant 24 : index
    %92 = vector.load %arg14[%c0_46, %c24] : memref<8x32xf32, #tpu.memory_space<vmem>>, vector<8x8xf32>
    tpu.vector_store %arg14[%c0_46, %c24], %91 {strides = array<i32>} : memref<8x32xf32, #tpu.memory_space<vmem>>, vector<8x8xf32>,
    %c0_47 = arith.constant 0 : index
    %c0_48 = arith.constant 0 : index
    %93 = vector.load %arg14[%c0_47, %c0_48] : memref<8x32xf32, #tpu.memory_space<vmem>>, vector<8x32xf32>
    %c0_49 = arith.constant 0 : index
    %c0_50 = arith.constant 0 : index
    %94 = vector.load %arg11[%c0_49, %c0_50] : memref<32x32xf32, #tpu.memory_space<vmem>>, vector<32x32xf32>
    %cst_51 = arith.constant dense<0.000000e+00> : vector<8x32xf32>
    %95 = tpu.matmul %93, %94, %cst_51 {dimension_numbers = #tpu.dot_dimension_numbers<[1], [0], [0], [1], [0, 0, 1, 1], [], []>} : vector<8x32xf32>, vector<32x32xf32>, vector<8x32xf32> -> vector<8x32xf32>
    %c0_52 = arith.constant 0 : index
    %c0_53 = arith.constant 0 : index
    %96 = vector.load %arg12[%c0_52, %c0_53] : memref<1x32xf32, #tpu.memory_space<vmem>>, vector<1x32xf32>
    %97 = vector.broadcast %96 : vector<1x32xf32> to vector<8x32xf32>
    %98 = arith.addf %95, %97 : vector<8x32xf32>
    %c0_54 = arith.constant 0 : index
    %c0_55 = arith.constant 0 : index
    %c0_56 = arith.constant 0 : index
    %99 = vector.load %arg13[%c0_54, %c0_55, %c0_56] : memref<1x8x32xf32, #tpu.memory_space<vmem>>, vector<1x8x32xf32>
    %100 = vector.shape_cast %99 : vector<1x8x32xf32> to vector<8x32xf32>
    %101 = vector.shape_cast %98 : vector<8x32xf32> to vector<1x8x32xf32>
    tpu.vector_store %arg13[%c0_54, %c0_55, %c0_56], %101 {strides = array<i32>} : memref<1x8x32xf32, #tpu.memory_space<vmem>>, vector<1x8x32xf32>,
    return
  }
  func.func @transform_0(%arg0: i32, %arg1: i32) -> (i32, i32, i32) {
    %c0_i32 = arith.constant 0 : i32
    %c0_i32_0 = arith.constant 0 : i32
    return %arg0, %arg1, %c0_i32 : i32, i32, i32
  }
  func.func @transform_1(%arg0: i32, %arg1: i32) -> (i32, i32, i32) {
    %c0_i32 = arith.constant 0 : i32
    %c0_i32_0 = arith.constant 0 : i32
    %c0_i32_1 = arith.constant 0 : i32
    return %arg0, %c0_i32, %c0_i32_0 : i32, i32, i32
  }
  func.func @transform_2(%arg0: i32, %arg1: i32) -> (i32, i32, i32) {
    %c0_i32 = arith.constant 0 : i32
    %c0_i32_0 = arith.constant 0 : i32
    %c0_i32_1 = arith.constant 0 : i32
    return %arg0, %c0_i32, %c0_i32_0 : i32, i32, i32
  }
  func.func @transform_3(%arg0: i32, %arg1: i32) -> (i32, i32) {
    %c0_i32 = arith.constant 0 : i32
    %c0_i32_0 = arith.constant 0 : i32
    %c0_i32_1 = arith.constant 0 : i32
    return %c0_i32, %c0_i32_0 : i32, i32
  }
  func.func @transform_4(%arg0: i32, %arg1: i32) -> (i32, i32) {
    %c0_i32 = arith.constant 0 : i32
    %c0_i32_0 = arith.constant 0 : i32
    %c0_i32_1 = arith.constant 0 : i32
    return %c0_i32, %c0_i32_0 : i32, i32
  }
  func.func @transform_5(%arg0: i32, %arg1: i32) -> (i32, i32) {
    %c0_i32 = arith.constant 0 : i32
    %c0_i32_0 = arith.constant 0 : i32
    %c0_i32_1 = arith.constant 0 : i32
    return %c0_i32, %c0_i32_0 : i32, i32
  }
  func.func @transform_6(%arg0: i32, %arg1: i32) -> (i32, i32) {
    %c0_i32 = arith.constant 0 : i32
    %c0_i32_0 = arith.constant 0 : i32
    %c0_i32_1 = arith.constant 0 : i32
    return %c0_i32, %c0_i32_0 : i32, i32
  }
  func.func @transform_7(%arg0: i32, %arg1: i32) -> (i32, i32) {
    %c0_i32 = arith.constant 0 : i32
    %c0_i32_0 = arith.constant 0 : i32
    %c0_i32_1 = arith.constant 0 : i32
    return %c0_i32, %c0_i32_0 : i32, i32
  }
  func.func @transform_8(%arg0: i32, %arg1: i32) -> (i32, i32) {
    %c0_i32 = arith.constant 0 : i32
    %c0_i32_0 = arith.constant 0 : i32
    %c0_i32_1 = arith.constant 0 : i32
    return %c0_i32, %c0_i32_0 : i32, i32
  }
  func.func @transform_9(%arg0: i32, %arg1: i32) -> (i32, i32) {
    %c0_i32 = arith.constant 0 : i32
    %c0_i32_0 = arith.constant 0 : i32
    %c0_i32_1 = arith.constant 0 : i32
    return %c0_i32, %c0_i32_0 : i32, i32
  }
  func.func @transform_10(%arg0: i32, %arg1: i32) -> (i32, i32) {
    %c0_i32 = arith.constant 0 : i32
    %c0_i32_0 = arith.constant 0 : i32
    %c0_i32_1 = arith.constant 0 : i32
    return %c0_i32, %c0_i32_0 : i32, i32
  }
  func.func @transform_11(%arg0: i32, %arg1: i32) -> (i32, i32, i32) {
    %c0_i32 = arith.constant 0 : i32
    %c0_i32_0 = arith.constant 0 : i32
    return %arg0, %arg1, %c0_i32 : i32, i32, i32
  }
}

</mosaic_0001>

<llo_original>
// kernel: tpu_custom_call.1
$region0: #{tpu_custom_call.1}
  #allocation0 [shape = 'u32[]', space=smem, size = 0x4, offset = 0x4, fixed_abs, tag = 'smem constant byte address 0x4 - core index']
  #allocation1 [shape = 'u32[72,128]{1,0:T(1,128)}', space=vmem, size = 0x9000, scoped, tag = 'internal scratch']
  #allocation2 [shape = 'f32[8,32]{1,0:T(8,128)}', space=vmem, size = 0x1000, scoped, tag = 'scratch operand']
  %s0 = inlined_call_operand.hbm [shape: f32[2,8,32], index: 0, kind: input, shape index: {}]
  %s1 = inlined_call_operand.hbm [shape: f32[2,8,32], index: 1, kind: input, shape index: {}]
  %s2 = inlined_call_operand.hbm [shape: f32[2,8,32], index: 2, kind: input, shape index: {}]
  %s3 = inlined_call_operand.hbm [shape: f32[32,32], index: 3, kind: input, shape index: {}]
  %s4 = inlined_call_operand.vmem [shape: f32[1,32], index: 4, kind: input, shape index: {}]
  %s5 = inlined_call_operand.hbm [shape: f32[32,32], index: 5, kind: input, shape index: {}]
  %s6 = inlined_call_operand.vmem [shape: f32[1,32], index: 6, kind: input, shape index: {}]
  %s7 = inlined_call_operand.hbm [shape: f32[32,32], index: 7, kind: input, shape index: {}]
  %s8 = inlined_call_operand.vmem [shape: f32[1,32], index: 8, kind: input, shape index: {}]
  %s9 = inlined_call_operand.hbm [shape: f32[32,32], index: 9, kind: input, shape index: {}]
  %s10 = inlined_call_operand.vmem [shape: f32[1,32], index: 10, kind: input, shape index: {}]
  %s11 = inlined_call_operand.hbm [shape: f32[2,8,32], index: 11, kind: output, shape index: {}]
  %s12 = sld [smem:[#allocation0]]
  $region105: #{tpu_custom_call.1} parent=0
    _
  %s14 = ssub.s32 1, %s12
  %s15 = scalar_select 0, %s14, %s12
  $region1: #{tpu_custom_call.1} parent=0
    #allocation3 [shape = 'u8[8192]{0}', space=vmem, size = 0x2000, scoped, tag = 'input window, operand 0']
    #allocation4 [shape = 's32[2]{0}', space=sflag, size = 0x8, scoped, tag = 'scoped memory for tpu_custom_call.1']
    #allocation5 [shape = 's32[2]{0}', space=sflag, size = 0x8, scoped, tag = 'scoped memory for tpu_custom_call.1']
    #allocation6 [shape = 'u8[8192]{0}', space=vmem, size = 0x2000, scoped, tag = 'input window, operand 1']
    #allocation7 [shape = 's32[2]{0}', space=sflag, size = 0x8, scoped, tag = 'scoped memory for tpu_custom_call.1']
    #allocation8 [shape = 'u8[8192]{0}', space=vmem, size = 0x2000, scoped, tag = 'input window, operand 2']
    #allocation9 [shape = 'u8[16384]{0}', space=vmem, size = 0x4000, scoped, tag = 'input window, operand 3, single buffered']
    #allocation10 [shape = 's32[1]{0}', space=sflag, size = 0x4, scoped, tag = 'scoped memory for tpu_custom_call.1']
    #allocation11 [shape = 'u8[16384]{0}', space=vmem, size = 0x4000, scoped, tag = 'input window, operand 5, single buffered']
    #allocation12 [shape = 'u8[16384]{0}', space=vmem, size = 0x4000, scoped, tag = 'input window, operand 7, single buffered']
    #allocation13 [shape = 's32[1]{0}', space=sflag, size = 0x4, scoped, tag = 'scoped memory for tpu_custom_call.1']
    #allocation14 [shape = 'u8[16384]{0}', space=vmem, size = 0x4000, scoped, tag = 'input window, operand 9, single buffered']
    #allocation15 [shape = 'u8[8192]{0}', space=vmem, size = 0x2000, scoped, tag = 'output window, operand 0']
    %16 = vsyncpa [#allocation4], 0
    %s17 = scalar_lea.sflag [#allocation4], 1
    %18 = vsyncpa %s17, 0
    %19 = vsyncpa [#allocation7], 0
    %s20 = scalar_lea.sflag [#allocation7], 1
    %21 = vsyncpa %s20, 0
    %22 = vsyncpa [#allocation10], 0
    %23 = vsyncpa [#allocation13], 0
    %24 = vsyncpa [#allocation5], 0
    %s25 = scalar_lea.sflag [#allocation5], 1
    %26 = vsyncpa %s25, 0
    loop: start=0, step=1, limit=4
    $region2: #{tpu_custom_call.1} parent=1 // loop_pre_header
      _
    $region3: #{tpu_custom_call.1} parent=1 // loop_header
      %s28 = sphi 0, %s32
      %p29 = scmp.ge.s32.totalorder %s28, 4
      %s35 = sphi 0, %s47
      %s36 = sphi 0, %s43
      %s37 = sphi 0, %s35
      %s38 = sphi 0, %s36
      %s39 = sphi 0, %s37
      %s40 = sphi 0, %s38
      %s52 = sphi 0, %s54
      %s55 = sphi 0, %s52
      %s56 = sphi 0, %s55
      %s72 = sphi 0, %s56
      %s78 = sphi 0, %s80
      %s81 = sphi 0, %s78
      %s82 = sphi 0, %s81
      %s98 = sphi 0, %s82
      %s104 = sphi 0, %s106
      %s107 = sphi 0, %s104
      %s108 = sphi 0, %s107
      %s124 = sphi 0, %s108
      %s128 = sphi 0, %s128
      %s130 = sphi 0, %s128
      %s131 = sphi 0, %s130
      %s145 = sphi 0, %s131
      %s149 = sphi 0, %s149
      %s151 = sphi 0, %s149
      %s152 = sphi 0, %s151
      %s166 = sphi 0, %s152
      %s170 = sphi 0, %s170
      %s172 = sphi 0, %s170
      %s173 = sphi 0, %s172
      %s187 = sphi 0, %s173
      %s191 = sphi 0, %s191
      %s193 = sphi 0, %s191
      %s194 = sphi 0, %s193
      %s208 = sphi 0, %s194
      %s212 = sphi 0, %s212
      %s214 = sphi 0, %s212
      %s215 = sphi 0, %s214
      %s229 = sphi 0, %s215
      %s233 = sphi 0, %s233
      %s235 = sphi 0, %s233
      %s236 = sphi 0, %s235
      %s250 = sphi 0, %s236
      %s254 = sphi 0, %s254
      %s256 = sphi 0, %s254
      %s257 = sphi 0, %s256
      %s271 = sphi 0, %s257
      %s275 = sphi 0, %s275
      %s277 = sphi 0, %s275
      %s278 = sphi 0, %s277
      %s292 = sphi 0, %s278
      %s300 = sphi 0, %s302
      %s303 = sphi 0, %s300
      %s304 = sphi 0, %s303
      %s320 = sphi 0, %s304
    $region4: #{tpu_custom_call.1} parent=1 // loop_header_branch
      %31 = sbr.rel (%p29) target = $region8
    $region5: #{tpu_custom_call.1} parent=1 // loop_body
      %s33 = ssub.s32 %s28, 1
      %s34 = ssub.s32 %s28, 2
      %s41 = sadd.s32 1, %s36
      %p42 = scmp.ge.s32.totalorder %s41, 1
      %s43 = scalar_select %p42, 0, %s41
      %s44 = sadd.s32 1, %s35
      %s45 = scalar_select %p42, %s44, %s35
      %p46 = scmp.ge.s32.totalorder %s45, 2
      %s47 = scalar_select %p46, 0, %s45
      %s48 = ssub.s32 %s35, %s47
      %s49 = ssub.s32 %s36, %s43
      %s50 = sor.u32 %s48, %s49
      %p51 = scmp.eq.s32.totalorder %s50, 0
      %s53 = sadd.s32 %s52, 1
      %s54 = scalar_select %p51, %s52, %s53
      %p57 = pneg %p51
      %p58 = scmp.eq.s32.totalorder %s28, 1
      %p59 = por %p57, %p58
      %p60 = scmp.ne.s32.totalorder %s52, %s55
      %p61 = scmp.eq.s32.totalorder %s28, 0
      %p62 = por %p60, %p61
      %p63 = scmp.ne.s32.totalorder %s52, %s55
      %p64 = scmp.eq.s32.totalorder %s33, 1
      %p65 = por %p63, %p64
      %p66 = scmp.ne.s32.totalorder %s55, %s56
      %p67 = scmp.eq.s32.totalorder %s33, 0
      %p68 = por %p66, %p67
      %p69 = scmp.ne.s32.totalorder %s55, %s56
      %p70 = scmp.eq.s32.totalorder %s34, 1
      %p71 = por %p69, %p70
      %p73 = scmp.ne.s32.totalorder %s56, %s72
      %p74 = scmp.eq.s32.totalorder %s34, 0
      %p75 = por %p73, %p74
      %s76 = ssub.s32 %s35, %s47
      %p77 = scmp.eq.s32.totalorder %s76, 0
      %s79 = sadd.s32 %s78, 1
      %s80 = scalar_select %p77, %s78, %s79
      %p83 = pneg %p77
      %p84 = scmp.eq.s32.totalorder %s28, 1
      %p85 = por %p83, %p84
      %p86 = scmp.ne.s32.totalorder %s78, %s81
      %p87 = scmp.eq.s32.totalorder %s28, 0
      %p88 = por %p86, %p87
      %p89 = scmp.ne.s32.totalorder %s78, %s81
      %p90 = scmp.eq.s32.totalorder %s33, 1
      %p91 = por %p89, %p90
      %p92 = scmp.ne.s32.totalorder %s81, %s82
      %p93 = scmp.eq.s32.totalorder %s33, 0
      %p94 = por %p92, %p93
      %p95 = scmp.ne.s32.totalorder %s81, %s82
      %p96 = scmp.eq.s32.totalorder %s34, 1
      %p97 = por %p95, %p96
      %p99 = scmp.ne.s32.totalorder %s82, %s98
      %p100 = scmp.eq.s32.totalorder %s34, 0
      %p101 = por %p99, %p100
      %s102 = ssub.s32 %s35, %s47
      %p103 = scmp.eq.s32.totalorder %s102, 0
      %s105 = sadd.s32 %s104, 1
      %s106 = scalar_select %p103, %s104, %s105
      %p109 = pneg %p103
      %p110 = scmp.eq.s32.totalorder %s28, 1
      %p111 = por %p109, %p110
      %p112 = scmp.ne.s32.totalorder %s104, %s107
      %p113 = scmp.eq.s32.totalorder %s28, 0
      %p114 = por %p112, %p113
      %p115 = scmp.ne.s32.totalorder %s104, %s107
      %p116 = scmp.eq.s32.totalorder %s33, 1
      %p117 = por %p115, %p116
      %p118 = scmp.ne.s32.totalorder %s107, %s108
      %p119 = scmp.eq.s32.totalorder %s33, 0
      %p120 = por %p118, %p119
      %p121 = scmp.ne.s32.totalorder %s107, %s108
      %p122 = scmp.eq.s32.totalorder %s34, 1
      %p123 = por %p121, %p122
      %p125 = scmp.ne.s32.totalorder %s108, %s124
      %p126 = scmp.eq.s32.totalorder %s34, 0
      %p127 = por %p125, %p126
      %s129 = sadd.s32 %s128, 1
      %p132 = scmp.eq.s32.totalorder %s28, 1
      %p133 = scmp.ne.s32.totalorder %s128, %s130
      %p134 = scmp.eq.s32.totalorder %s28, 0
      %p135 = por %p133, %p134
      %p136 = scmp.ne.s32.totalorder %s128, %s130
      %p137 = scmp.eq.s32.totalorder %s33, 1
      %p138 = por %p136, %p137
      %p139 = scmp.ne.s32.totalorder %s130, %s131
      %p140 = scmp.eq.s32.totalorder %s33, 0
      %p141 = por %p139, %p140
      %p142 = scmp.ne.s32.totalorder %s130, %s131
      %p143 = scmp.eq.s32.totalorder %s34, 1
      %p144 = por %p142, %p143
      %p146 = scmp.ne.s32.totalorder %s131, %s145
      %p147 = scmp.eq.s32.totalorder %s34, 0
      %p148 = por %p146, %p147
      %s150 = sadd.s32 %s149, 1
      %p153 = scmp.eq.s32.totalorder %s28, 1
      %p154 = scmp.ne.s32.totalorder %s149, %s151
      %p155 = scmp.eq.s32.totalorder %s28, 0
      %p156 = por %p154, %p155
      %p157 = scmp.ne.s32.totalorder %s149, %s151
      %p158 = scmp.eq.s32.totalorder %s33, 1
      %p159 = por %p157, %p158
      %p160 = scmp.ne.s32.totalorder %s151, %s152
      %p161 = scmp.eq.s32.totalorder %s33, 0
      %p162 = por %p160, %p161
      %p163 = scmp.ne.s32.totalorder %s151, %s152
      %p164 = scmp.eq.s32.totalorder %s34, 1
      %p165 = por %p163, %p164
      %p167 = scmp.ne.s32.totalorder %s152, %s166
      %p168 = scmp.eq.s32.totalorder %s34, 0
      %p169 = por %p167, %p168
      %s171 = sadd.s32 %s170, 1
      %p174 = scmp.eq.s32.totalorder %s28, 1
      %p175 = scmp.ne.s32.totalorder %s170, %s172
      %p176 = scmp.eq.s32.totalorder %s28, 0
      %p177 = por %p175, %p176
      %p178 = scmp.ne.s32.totalorder %s170, %s172
      %p179 = scmp.eq.s32.totalorder %s33, 1
      %p180 = por %p178, %p179
      %p181 = scmp.ne.s32.totalorder %s172, %s173
      %p182 = scmp.eq.s32.totalorder %s33, 0
      %p183 = por %p181, %p182
      %p184 = scmp.ne.s32.totalorder %s172, %s173
      %p185 = scmp.eq.s32.totalorder %s34, 1
      %p186 = por %p184, %p185
      %p188 = scmp.ne.s32.totalorder %s173, %s187
      %p189 = scmp.eq.s32.totalorder %s34, 0
      %p190 = por %p188, %p189
      %s192 = sadd.s32 %s191, 1
      %p195 = scmp.eq.s32.totalorder %s28, 1
      %p196 = scmp.ne.s32.totalorder %s191, %s193
      %p197 = scmp.eq.s32.totalorder %s28, 0
      %p198 = por %p196, %p197
      %p199 = scmp.ne.s32.totalorder %s191, %s193
      %p200 = scmp.eq.s32.totalorder %s33, 1
      %p201 = por %p199, %p200
      %p202 = scmp.ne.s32.totalorder %s193, %s194
      %p203 = scmp.eq.s32.totalorder %s33, 0
      %p204 = por %p202, %p203
      %p205 = scmp.ne.s32.totalorder %s193, %s194
      %p206 = scmp.eq.s32.totalorder %s34, 1
      %p207 = por %p205, %p206
      %p209 = scmp.ne.s32.totalorder %s194, %s208
      %p210 = scmp.eq.s32.totalorder %s34, 0
      %p211 = por %p209, %p210
      %s213 = sadd.s32 %s212, 1
      %p216 = scmp.eq.s32.totalorder %s28, 1
      %p217 = scmp.ne.s32.totalorder %s212, %s214
      %p218 = scmp.eq.s32.totalorder %s28, 0
      %p219 = por %p217, %p218
      %p220 = scmp.ne.s32.totalorder %s212, %s214
      %p221 = scmp.eq.s32.totalorder %s33, 1
      %p222 = por %p220, %p221
      %p223 = scmp.ne.s32.totalorder %s214, %s215
      %p224 = scmp.eq.s32.totalorder %s33, 0
      %p225 = por %p223, %p224
      %p226 = scmp.ne.s32.totalorder %s214, %s215
      %p227 = scmp.eq.s32.totalorder %s34, 1
      %p228 = por %p226, %p227
      %p230 = scmp.ne.s32.totalorder %s215, %s229
      %p231 = scmp.eq.s32.totalorder %s34, 0
      %p232 = por %p230, %p231
      %s234 = sadd.s32 %s233, 1
      %p237 = scmp.eq.s32.totalorder %s28, 1
      %p238 = scmp.ne.s32.totalorder %s233, %s235
      %p239 = scmp.eq.s32.totalorder %s28, 0
      %p240 = por %p238, %p239
      %p241 = scmp.ne.s32.totalorder %s233, %s235
      %p242 = scmp.eq.s32.totalorder %s33, 1
      %p243 = por %p241, %p242
      %p244 = scmp.ne.s32.totalorder %s235, %s236
      %p245 = scmp.eq.s32.totalorder %s33, 0
      %p246 = por %p244, %p245
      %p247 = scmp.ne.s32.totalorder %s235, %s236
      %p248 = scmp.eq.s32.totalorder %s34, 1
      %p249 = por %p247, %p248
      %p251 = scmp.ne.s32.totalorder %s236, %s250
      %p252 = scmp.eq.s32.totalorder %s34, 0
      %p253 = por %p251, %p252
      %s255 = sadd.s32 %s254, 1
      %p258 = scmp.eq.s32.totalorder %s28, 1
      %p259 = scmp.ne.s32.totalorder %s254, %s256
      %p260 = scmp.eq.s32.totalorder %s28, 0
      %p261 = por %p259, %p260
      %p262 = scmp.ne.s32.totalorder %s254, %s256
      %p263 = scmp.eq.s32.totalorder %s33, 1
      %p264 = por %p262, %p263
      %p265 = scmp.ne.s32.totalorder %s256, %s257
      %p266 = scmp.eq.s32.totalorder %s33, 0
      %p267 = por %p265, %p266
      %p268 = scmp.ne.s32.totalorder %s256, %s257
      %p269 = scmp.eq.s32.totalorder %s34, 1
      %p270 = por %p268, %p269
      %p272 = scmp.ne.s32.totalorder %s257, %s271
      %p273 = scmp.eq.s32.totalorder %s34, 0
      %p274 = por %p272, %p273
      %s276 = sadd.s32 %s275, 1
      %p279 = scmp.eq.s32.totalorder %s28, 1
      %p280 = scmp.ne.s32.totalorder %s275, %s277
      %p281 = scmp.eq.s32.totalorder %s28, 0
      %p282 = por %p280, %p281
      %p283 = scmp.ne.s32.totalorder %s275, %s277
      %p284 = scmp.eq.s32.totalorder %s33, 1
      %p285 = por %p283, %p284
      %p286 = scmp.ne.s32.totalorder %s277, %s278
      %p287 = scmp.eq.s32.totalorder %s33, 0
      %p288 = por %p286, %p287
      %p289 = scmp.ne.s32.totalorder %s277, %s278
      %p290 = scmp.eq.s32.totalorder %s34, 1
      %p291 = por %p289, %p290
      %p293 = scmp.ne.s32.totalorder %s278, %s292
      %p294 = scmp.eq.s32.totalorder %s34, 0
      %p295 = por %p293, %p294
      %s296 = ssub.s32 %s35, %s47
      %s297 = ssub.s32 %s36, %s43
      %s298 = sor.u32 %s296, %s297
      %p299 = scmp.eq.s32.totalorder %s298, 0
      %s301 = sadd.s32 %s300, 1
      %s302 = scalar_select %p299, %s300, %s301
      %p305 = pneg %p299
      %p306 = scmp.eq.s32.totalorder %s28, 1
      %p307 = por %p305, %p306
      %p308 = scmp.ne.s32.totalorder %s300, %s303
      %p309 = scmp.eq.s32.totalorder %s28, 0
      %p310 = por %p308, %p309
      %p311 = scmp.ne.s32.totalorder %s300, %s303
      %p312 = scmp.eq.s32.totalorder %s33, 1
      %p313 = por %p311, %p312
      %p314 = scmp.ne.s32.totalorder %s303, %s304
      %p315 = scmp.eq.s32.totalorder %s33, 0
      %p316 = por %p314, %p315
      %p317 = scmp.ne.s32.totalorder %s303, %s304
      %p318 = scmp.eq.s32.totalorder %s34, 1
      %p319 = por %p317, %p318
      %p321 = scmp.ne.s32.totalorder %s304, %s320
      %p322 = scmp.eq.s32.totalorder %s34, 0
      %p323 = por %p321, %p322
      %p324 = scmp.le.s32.totalorder 1, %s28
      %p325 = scmp.lt.s32.totalorder %s28, 3
      %p326 = pnand %p324, %p325
      %p327 = pneg %p326
      // Predicated region
      $region9: #{tpu_custom_call.1} parent=5 // pred_check
        _
      $region10: #{tpu_custom_call.1} parent=5 // pred_check_branch
        %329 = sbr.rel (%p326) target = $region12
      $region11: #{tpu_custom_call.1} parent=5 // pred_region
        %s330 = ssub.s32 %s28, 1
        // Predicated region
        $region13: #{tpu_custom_call.1} parent=11 // pred_check
          %p331 = pneg %p141
        $region14: #{tpu_custom_call.1} parent=11 // pred_check_branch
          %333 = sbr.rel (%p331) target = $region16
        $region15: #{tpu_custom_call.1} parent=11 // pred_region
          %335 = vsyncadd [#allocation10], 0
          %s336 = sshll.u32 %s3, 4
          %s337 = int_to_ptr.hbm [resolvable:$true] %s336
          %s338 = sshll.u32 [#allocation9], 4
          %s339 = int_to_ptr.vmem [resolvable:$true] %s338
          %344 = dma.hbm_to_vmem [thread:$0]  %s337, 512, %s339, [#allocation10], 128, 128, 8
        $region16: #{tpu_custom_call.1} parent=11 // pred_fallthru
          _
        // Predicated region
        $region17: #{tpu_custom_call.1} parent=11 // pred_check
          %p345 = pneg %p162
        $region18: #{tpu_custom_call.1} parent=11 // pred_check_branch
          %347 = sbr.rel (%p345) target = $region20
        $region19: #{tpu_custom_call.1} parent=11 // pred_region
          _
        $region20: #{tpu_custom_call.1} parent=11 // pred_fallthru
          _
        // Predicated region
        $region21: #{tpu_custom_call.1} parent=11 // pred_check
          %p348 = pneg %p183
        $region22: #{tpu_custom_call.1} parent=11 // pred_check_branch
          %350 = sbr.rel (%p348) target = $region24
        $region23: #{tpu_custom_call.1} parent=11 // pred_region
          %352 = vsyncadd [#allocation10], 0
          %s353 = sshll.u32 %s5, 4
          %s354 = int_to_ptr.hbm [resolvable:$true] %s353
          %s355 = sshll.u32 [#allocation11], 4
          %s356 = int_to_ptr.vmem [resolvable:$true] %s355
          %361 = dma.hbm_to_vmem [thread:$0]  %s354, 512, %s356, [#allocation10], 128, 128, 8
        $region24: #{tpu_custom_call.1} parent=11 // pred_fallthru
          _
        // Predicated region
        $region25: #{tpu_custom_call.1} parent=11 // pred_check
          %p362 = pneg %p204
        $region26: #{tpu_custom_call.1} parent=11 // pred_check_branch
          %364 = sbr.rel (%p362) target = $region28
        $region27: #{tpu_custom_call.1} parent=11 // pred_region
          _
        $region28: #{tpu_custom_call.1} parent=11 // pred_fallthru
          _
        // Predicated region
        $region29: #{tpu_custom_call.1} parent=11 // pred_check
          %p365 = pneg %p225
        $region30: #{tpu_custom_call.1} parent=11 // pred_check_branch
          %367 = sbr.rel (%p365) target = $region32
        $region31: #{tpu_custom_call.1} parent=11 // pred_region
          %369 = vsyncadd [#allocation13], 0
          %s370 = sshll.u32 %s7, 4
          %s371 = int_to_ptr.hbm [resolvable:$true] %s370
          %s372 = sshll.u32 [#allocation12], 4
          %s373 = int_to_ptr.vmem [resolvable:$true] %s372
          %378 = dma.hbm_to_vmem [thread:$0]  %s371, 512, %s373, [#allocation13], 128, 128, 8
        $region32: #{tpu_custom_call.1} parent=11 // pred_fallthru
          _
        // Predicated region
        $region33: #{tpu_custom_call.1} parent=11 // pred_check
          %p379 = pneg %p246
        $region34: #{tpu_custom_call.1} parent=11 // pred_check_branch
          %381 = sbr.rel (%p379) target = $region36
        $region35: #{tpu_custom_call.1} parent=11 // pred_region
          _
        $region36: #{tpu_custom_call.1} parent=11 // pred_fallthru
          _
        // Predicated region
        $region37: #{tpu_custom_call.1} parent=11 // pred_check
          %p382 = pneg %p267
        $region38: #{tpu_custom_call.1} parent=11 // pred_check_branch
          %384 = sbr.rel (%p382) target = $region40
        $region39: #{tpu_custom_call.1} parent=11 // pred_region
          %386 = vsyncadd [#allocation13], 0
          %s387 = sshll.u32 %s9, 4
          %s388 = int_to_ptr.hbm [resolvable:$true] %s387
          %s389 = sshll.u32 [#allocation14], 4
          %s390 = int_to_ptr.vmem [resolvable:$true] %s389
          %395 = dma.hbm_to_vmem [thread:$0]  %s388, 512, %s390, [#allocation13], 128, 128, 8
        $region40: #{tpu_custom_call.1} parent=11 // pred_fallthru
          _
        // Predicated region
        $region41: #{tpu_custom_call.1} parent=11 // pred_check
          %p396 = pneg %p288
        $region42: #{tpu_custom_call.1} parent=11 // pred_check_branch
          %398 = sbr.rel (%p396) target = $region44
        $region43: #{tpu_custom_call.1} parent=11 // pred_region
          _
        $region44: #{tpu_custom_call.1} parent=11 // pred_fallthru
          _
      $region12: #{tpu_custom_call.1} parent=5 // pred_fallthru
        _
      %p399 = scmp.lt.s32.totalorder %s28, 2
      // Predicated region
      $region45: #{tpu_custom_call.1} parent=5 // pred_check
        %p400 = pneg %p399
      $region46: #{tpu_custom_call.1} parent=5 // pred_check_branch
        %402 = sbr.rel (%p400) target = $region48
      $region47: #{tpu_custom_call.1} parent=5 // pred_region
        // Predicated region
        $region49: #{tpu_custom_call.1} parent=47 // pred_check
          %p403 = pneg %p62
        $region50: #{tpu_custom_call.1} parent=47 // pred_check_branch
          %405 = sbr.rel (%p403) target = $region52
        $region51: #{tpu_custom_call.1} parent=47 // pred_region
          %s406 = sand.u32 %s52, 1
          %s407 = scalar_lea.sflag [#allocation4], %s406
          %s408 = sand.u32 %s52, 1
          %s409 = smul.addr %s408, 8
          %s410 = scalar_lea.vmem [#allocation3], %s409
          %412 = vsyncadd %s407, 0
          %s413 = sadd.s32 %s36, %s35
          %s414 = smul.addr %s413, 8
          %s415 = scalar_lea.hbm %s0, %s414
          %s417 = sshll.u32 %s415, 4
          %s418 = int_to_ptr.hbm [resolvable:$true] %s417
          %s419 = sshll.u32 %s410, 4
          %s420 = int_to_ptr.vmem [resolvable:$true] %s419
          %422 = dma.hbm_to_vmem [thread:$0]  %s418, 128, %s420, %s407
        $region52: #{tpu_custom_call.1} parent=47 // pred_fallthru
          _
        // Predicated region
        $region53: #{tpu_custom_call.1} parent=47 // pred_check
          %p423 = pneg %p88
        $region54: #{tpu_custom_call.1} parent=47 // pred_check_branch
          %425 = sbr.rel (%p423) target = $region56
        $region55: #{tpu_custom_call.1} parent=47 // pred_region
          %s426 = sand.u32 %s28, 1
          %s427 = scalar_lea.sflag [#allocation7], %s426
          %s428 = sand.u32 %s78, 1
          %s429 = smul.addr %s428, 8
          %s430 = scalar_lea.vmem [#allocation6], %s429
          %432 = vsyncadd %s427, 0
          %s433 = smul.addr %s35, 8
          %s434 = scalar_lea.hbm %s1, %s433
          %s436 = sshll.u32 %s434, 4
          %s437 = int_to_ptr.hbm [resolvable:$true] %s436
          %s438 = sshll.u32 %s430, 4
          %s439 = int_to_ptr.vmem [resolvable:$true] %s438
          %441 = dma.hbm_to_vmem [thread:$0]  %s437, 128, %s439, %s427
        $region56: #{tpu_custom_call.1} parent=47 // pred_fallthru
          _
        // Predicated region
        $region57: #{tpu_custom_call.1} parent=47 // pred_check
          %p442 = pneg %p114
        $region58: #{tpu_custom_call.1} parent=47 // pred_check_branch
          %444 = sbr.rel (%p442) target = $region60
        $region59: #{tpu_custom_call.1} parent=47 // pred_region
          %s445 = sand.u32 %s28, 1
          %s446 = scalar_lea.sflag [#allocation7], %s445
          %s447 = sand.u32 %s104, 1
          %s448 = smul.addr %s447, 8
          %s449 = scalar_lea.vmem [#allocation8], %s448
          %451 = vsyncadd %s446, 0
          %s452 = smul.addr %s35, 8
          %s453 = scalar_lea.hbm %s2, %s452
          %s455 = sshll.u32 %s453, 4
          %s456 = int_to_ptr.hbm [resolvable:$true] %s455
          %s457 = sshll.u32 %s449, 4
          %s458 = int_to_ptr.vmem [resolvable:$true] %s457
          %460 = dma.hbm_to_vmem [thread:$0]  %s456, 128, %s458, %s446
        $region60: #{tpu_custom_call.1} parent=47 // pred_fallthru
          _
      $region48: #{tpu_custom_call.1} parent=5 // pred_fallthru
        _
      %p461 = scmp.le.s32.totalorder 1, %s28
      %p462 = scmp.lt.s32.totalorder %s28, 3
      %p463 = pnand %p461, %p462
      %p464 = pneg %p463
      // Predicated region
      $region61: #{tpu_custom_call.1} parent=5 // pred_check
        _
      $region62: #{tpu_custom_call.1} parent=5 // pred_check_branch
        %466 = sbr.rel (%p463) target = $region64
      $region63: #{tpu_custom_call.1} parent=5 // pred_region
        %s467 = ssub.s32 %s28, 1
        %s468 = sand.u32 %s55, 1
        %s469 = scalar_lea.sflag [#allocation4], %s468
        %s470 = sand.u32 %s55, 1
        %s471 = smul.addr %s470, 8
        %s472 = scalar_lea.vmem [#allocation3], %s471
        // Predicated region
        $region65: #{tpu_custom_call.1} parent=63 // pred_check
          %p473 = pneg %p68
        $region66: #{tpu_custom_call.1} parent=63 // pred_check_branch
          %475 = sbr.rel (%p473) target = $region68
        $region67: #{tpu_custom_call.1} parent=63 // pred_region
          %477 = dma.done %s469, 128
        $region68: #{tpu_custom_call.1} parent=63 // pred_fallthru
          _
        %s478 = sand.u32 %s33, 1
        %s479 = scalar_lea.sflag [#allocation7], %s478
        %s480 = sand.u32 %s81, 1
        %s481 = smul.addr %s480, 8
        %s482 = scalar_lea.vmem [#allocation6], %s481
        // Predicated region
        $region69: #{tpu_custom_call.1} parent=63 // pred_check
          %p483 = pneg %p94
        $region70: #{tpu_custom_call.1} parent=63 // pred_check_branch
          %485 = sbr.rel (%p483) target = $region72
        $region71: #{tpu_custom_call.1} parent=63 // pred_region
          %487 = dma.done %s479, 128
        $region72: #{tpu_custom_call.1} parent=63 // pred_fallthru
          _
        %s488 = sand.u32 %s33, 1
        %s489 = scalar_lea.sflag [#allocation7], %s488
        %s490 = sand.u32 %s107, 1
        %s491 = smul.addr %s490, 8
        %s492 = scalar_lea.vmem [#allocation8], %s491
        // Predicated region
        $region73: #{tpu_custom_call.1} parent=63 // pred_check
          %p493 = pneg %p120
        $region74: #{tpu_custom_call.1} parent=63 // pred_check_branch
          %495 = sbr.rel (%p493) target = $region76
        $region75: #{tpu_custom_call.1} parent=63 // pred_region
          %497 = dma.done %s489, 128
        $region76: #{tpu_custom_call.1} parent=63 // pred_fallthru
          _
        // Predicated region
        $region77: #{tpu_custom_call.1} parent=63 // pred_check
          %p498 = pneg %p141
        $region78: #{tpu_custom_call.1} parent=63 // pred_check_branch
          %500 = sbr.rel (%p498) target = $region80
        $region79: #{tpu_custom_call.1} parent=63 // pred_region
          %502 = dma.done [#allocation10], 512
        $region80: #{tpu_custom_call.1} parent=63 // pred_fallthru
          _
        // Predicated region
        $region81: #{tpu_custom_call.1} parent=63 // pred_check
          %p503 = pneg %p183
        $region82: #{tpu_custom_call.1} parent=63 // pred_check_branch
          %505 = sbr.rel (%p503) target = $region84
        $region83: #{tpu_custom_call.1} parent=63 // pred_region
          %507 = dma.done [#allocation10], 512
        $region84: #{tpu_custom_call.1} parent=63 // pred_fallthru
          _
        // Predicated region
        $region85: #{tpu_custom_call.1} parent=63 // pred_check
          %p508 = pneg %p225
        $region86: #{tpu_custom_call.1} parent=63 // pred_check_branch
          %510 = sbr.rel (%p508) target = $region88
        $region87: #{tpu_custom_call.1} parent=63 // pred_region
          %512 = dma.done [#allocation13], 512
        $region88: #{tpu_custom_call.1} parent=63 // pred_fallthru
          _
        // Predicated region
        $region89: #{tpu_custom_call.1} parent=63 // pred_check
          %p513 = pneg %p267
        $region90: #{tpu_custom_call.1} parent=63 // pred_check_branch
          %515 = sbr.rel (%p513) target = $region92
        $region91: #{tpu_custom_call.1} parent=63 // pred_region
          %517 = dma.done [#allocation13], 512
        $region92: #{tpu_custom_call.1} parent=63 // pred_fallthru
          _
        %s518 = sand.u32 %s55, 1
        %s519 = scalar_lea.sflag [#allocation4], %s518
        %s520 = sand.u32 %s55, 1
        %s521 = smul.addr %s520, 8
        %s522 = scalar_lea.vmem [#allocation3], %s521
        %p523 = pneg %p68
        %p524 = pneg %p65
        %s525 = sand.u32 %s33, 1
        %s526 = scalar_lea.sflag [#allocation7], %s525
        %s527 = sand.u32 %s81, 1
        %s528 = smul.addr %s527, 8
        %s529 = scalar_lea.vmem [#allocation6], %s528
        %p530 = pneg %p94
        %p531 = pneg %p91
        %s532 = sand.u32 %s33, 1
        %s533 = scalar_lea.sflag [#allocation7], %s532
        %s534 = sand.u32 %s107, 1
        %s535 = smul.addr %s534, 8
        %s536 = scalar_lea.vmem [#allocation8], %s535
        %p537 = pneg %p120
        %p538 = pneg %p117
        %p539 = pneg %p141
        %p540 = pneg %p138
        %p541 = pneg %p162
        %p542 = pneg %p159
        %p543 = pneg %p183
        %p544 = pneg %p180
        %p545 = pneg %p204
        %p546 = pneg %p201
        %p547 = pneg %p225
        %p548 = pneg %p222
        %p549 = pneg %p246
        %p550 = pneg %p243
        %p551 = pneg %p267
        %p552 = pneg %p264
        %p553 = pneg %p288
        %p554 = pneg %p285
        %p555 = pneg %p316
        %p556 = pneg %p313
        %s557 = sand.u32 %s303, 1
        %s558 = scalar_lea.sflag [#allocation5], %s557
        %s559 = sand.u32 %s303, 1
        %s560 = smul.addr %s559, 8
        %s561 = scalar_lea.vmem [#allocation15], %s560
        %v562 = vld [vmem:[%s472] sm:$0xff]
        %v563 = vld [vmem:[%s482] sm:$0xff]
        %v564 = vld [vmem:[%s492] sm:$0xff]
        %v565 = vld [vmem:[#allocation9] sm:$0xff]
        %v566 = vld [vmem:[#allocation9 + $0x8] sm:$0xff]
        %v567 = vld [vmem:[#allocation9 + $0x10] sm:$0xff]
        %v568 = vld [vmem:[#allocation9 + $0x18] sm:$0xff]
        %v569 = vld [vmem:[%s4] sm:$0x1]
        %v571 = vperm.slane %v569, 0
        %vm573 = vcmask 261120
        %v575 = vsel %vm573, %v562, 0
        %577 = vmatpush.msra.mxu0 0.0
        %578 = vmatpush.msra.mxu0 0.0
        %579 = vmatpush.msra.mxu0 0.0
        %580 = vmatpush.msra.mxu0 0.0
        %581 = vmatpush.msra.mxu0 0.0
        %582 = vmatpush.msra.mxu0 0.0
        %583 = vmatpush.msra.mxu0 0.0
        %584 = vmatpush.msra.mxu0 0.0
        %585 = vmatpush.msra.mxu0 0.0
        %586 = vmatpush.msra.mxu0 0.0
        %587 = vmatpush.msra.mxu0 0.0
        %588 = vmatpush.msra.mxu0 0.0
        %589 = vmatpush.msra.mxu0 %v568
        %590 = vmatpush.msra.mxu0 %v567
        %591 = vmatpush.msra.mxu0 %v566
        %592 = vmatpush.msra.mxu0 %v565
        %593 = vmatmul.f32.gmra.mxu0 %v575
        %v594 = vpop.f32.mrf.mxu0
        %v595 = vadd.f32 %v571, %v594
        %596 = vdwg.mxu0
        %v597 = vld [vmem:[#allocation11] sm:$0xff]
        %v598 = vld [vmem:[#allocation11 + $0x8] sm:$0xff]
        %v599 = vld [vmem:[#allocation11 + $0x10] sm:$0xff]
        %v600 = vld [vmem:[#allocation11 + $0x18] sm:$0xff]
        %v601 = vld [vmem:[%s6] sm:$0x1]
        %v603 = vperm.slane %v601, 0
        %v606 = vsel %vm573, %v563, 0
        %608 = vmatpush.msra.mxu0 0.0
        %609 = vmatpush.msra.mxu0 0.0
        %610 = vmatpush.msra.mxu0 0.0
        %611 = vmatpush.msra.mxu0 0.0
        %612 = vmatpush.msra.mxu0 0.0
        %613 = vmatpush.msra.mxu0 0.0
        %614 = vmatpush.msra.mxu0 0.0
        %615 = vmatpush.msra.mxu0 0.0
        %616 = vmatpush.msra.mxu0 0.0
        %617 = vmatpush.msra.mxu0 0.0
        %618 = vmatpush.msra.mxu0 0.0
        %619 = vmatpush.msra.mxu0 0.0
        %620 = vmatpush.msra.mxu0 %v600
        %621 = vmatpush.msra.mxu0 %v599
        %622 = vmatpush.msra.mxu0 %v598
        %623 = vmatpush.msra.mxu0 %v597
        %624 = vmatmul.f32.gmra.mxu0 %v606
        %v625 = vpop.f32.mrf.mxu0
        %v626 = vadd.f32 %v603, %v625
        %627 = vdwg.mxu0
        %v628 = vld [vmem:[#allocation12] sm:$0xff]
        %v629 = vld [vmem:[#allocation12 + $0x8] sm:$0xff]
        %v630 = vld [vmem:[#allocation12 + $0x10] sm:$0xff]
        %v631 = vld [vmem:[#allocation12 + $0x18] sm:$0xff]
        %v632 = vld [vmem:[%s8] sm:$0x1]
        %v634 = vperm.slane %v632, 0
        %v637 = vsel %vm573, %v564, 0
        %639 = vmatpush.msra.mxu0 0.0
        %640 = vmatpush.msra.mxu0 0.0
        %641 = vmatpush.msra.mxu0 0.0
        %642 = vmatpush.msra.mxu0 0.0
        %643 = vmatpush.msra.mxu0 0.0
        %644 = vmatpush.msra.mxu0 0.0
        %645 = vmatpush.msra.mxu0 0.0
        %646 = vmatpush.msra.mxu0 0.0
        %647 = vmatpush.msra.mxu0 0.0
        %648 = vmatpush.msra.mxu0 0.0
        %649 = vmatpush.msra.mxu0 0.0
        %650 = vmatpush.msra.mxu0 0.0
        %651 = vmatpush.msra.mxu0 %v631
        %652 = vmatpush.msra.mxu0 %v630
        %653 = vmatpush.msra.mxu0 %v629
        %654 = vmatpush.msra.mxu0 %v628
        %655 = vmatmul.f32.gmra.mxu0 %v637
        %v656 = vpop.f32.mrf.mxu0
        %v657 = vadd.f32 %v634, %v656
        %658 = vdwg.mxu0
        %vm659 = vcmask 64512
        %v661 = vsel %vm659, %v595, 0
        %v664 = vsel %vm659, %v626, 0
        %666 = vmatpush.xpose.msra.mxu0 0.0
        %667 = vmatpush.xpose.msra.mxu0 0.0
        %668 = vmatpush.xpose.msra.mxu0 0.0
        %669 = vmatpush.xpose.msra.mxu0 0.0
        %670 = vmatpush.xpose.msra.mxu0 0.0
        %671 = vmatpush.xpose.msra.mxu0 0.0
        %672 = vmatpush.xpose.msra.mxu0 0.0
        %673 = vmatpush.xpose.msra.mxu0 0.0
        %674 = vmatpush.xpose.msra.mxu0 0.0
        %675 = vmatpush.xpose.msra.mxu0 0.0
        %676 = vmatpush.xpose.msra.mxu0 0.0
        %677 = vmatpush.xpose.msra.mxu0 0.0
        %678 = vmatpush.xpose.msra.mxu0 0.0
        %679 = vmatpush.xpose.msra.mxu0 0.0
        %680 = vmatpush.xpose.msra.mxu0 0.0
        %681 = vmatpush.xpose.msra.mxu0 %v664
        %682 = vmatmul.f32.gmra.mxu0 %v661
        %v683 = vpop.f32.mrf.mxu0
        %v684 = vadd.f32 0.0, %v683
        %685 = vdwg.mxu0
        %v686 = vmul.f32 %v684, 0.35355338
        %v687 = vsel %vm659, %v686, -inf
        %688 = vmax.xlane.f32.xlu0 %v687
        %v689 = vpop.xlane.xlu0 %688
        %v690 = vsub.f32 %v686, %v689
        %v691 = vmul.f32 %v690, 1.442695
        %v692 = vpow.pop %v691
        %v693 = vsel %vm659, %v692, 0.0
        %694 = vadd.xlane.f32.xlu0 %v693
        %v695 = vpop.xlane.xlu0 %694
        %v696 = vrcp.pop %v695
        %v697 = vmul.f32 %v692, %v696
        %v699 = vsel %vm659, %v697, 0
        %701 = vmatpush.msra.mxu0 0.0
        %702 = vmatpush.msra.mxu0 0.0
        %703 = vmatpush.msra.mxu0 0.0
        %704 = vmatpush.msra.mxu0 0.0
        %705 = vmatpush.msra.mxu0 0.0
        %706 = vmatpush.msra.mxu0 0.0
        %707 = vmatpush.msra.mxu0 0.0
        %708 = vmatpush.msra.mxu0 0.0
        %709 = vmatpush.msra.mxu0 0.0
        %710 = vmatpush.msra.mxu0 0.0
        %711 = vmatpush.msra.mxu0 0.0
        %712 = vmatpush.msra.mxu0 0.0
        %713 = vmatpush.msra.mxu0 0.0
        %714 = vmatpush.msra.mxu0 0.0
        %715 = vmatpush.msra.mxu0 0.0
        %716 = vmatpush.msra.mxu0 %v657
        %717 = vmatmul.f32.gmra.mxu0 %v699
        %v718 = vpop.f32.mrf.mxu0
        %v719 = vadd.f32 0.0, %v718
        %720 = vdwg.mxu0
        %721 = vst.msk [vmem:[#allocation2] sm:$0xff] %vm659, %v719
        %722 = vrot.lane.b32.xlu0 %v595, 120
        %v723 = vpop.permute.xlu0 %722
        %724 = vrot.lane.b32.xlu0 %v626, 120
        %v725 = vpop.permute.xlu0 %724
        %v726 = vsel %vm659, %v723, 0
        %v728 = vsel %vm659, %v725, 0
        %730 = vmatpush.xpose.msra.mxu0 0.0
        %731 = vmatpush.xpose.msra.mxu0 0.0
        %732 = vmatpush.xpose.msra.mxu0 0.0
        %733 = vmatpush.xpose.msra.mxu0 0.0
        %734 = vmatpush.xpose.msra.mxu0 0.0
        %735 = vmatpush.xpose.msra.mxu0 0.0
        %736 = vmatpush.xpose.msra.mxu0 0.0
        %737 = vmatpush.xpose.msra.mxu0 0.0
        %738 = vmatpush.xpose.msra.mxu0 0.0
        %739 = vmatpush.xpose.msra.mxu0 0.0
        %740 = vmatpush.xpose.msra.mxu0 0.0
        %741 = vmatpush.xpose.msra.mxu0 0.0
        %742 = vmatpush.xpose.msra.mxu0 0.0
        %743 = vmatpush.xpose.msra.mxu0 0.0
        %744 = vmatpush.xpose.msra.mxu0 0.0
        %745 = vmatpush.xpose.msra.mxu0 %v728
        %746 = vmatmul.f32.gmra.mxu0 %v726
        %v747 = vpop.f32.mrf.mxu0
        %v748 = vadd.f32 0.0, %v747
        %749 = vdwg.mxu0
        %v750 = vmul.f32 %v748, 0.35355338
        %v751 = vsel %vm659, %v750, -inf
        %752 = vmax.xlane.f32.xlu0 %v751
        %v753 = vpop.xlane.xlu0 %752
        %v754 = vsub.f32 %v750, %v753
        %v755 = vmul.f32 %v754, 1.442695
        %v756 = vpow.pop %v755
        %v757 = vsel %vm659, %v756, 0.0
        %758 = vadd.xlane.f32.xlu0 %v757
        %v759 = vpop.xlane.xlu0 %758
        %v760 = vrcp.pop %v759
        %v761 = vmul.f32 %v756, %v760
        %763 = vrot.lane.b32.xlu0 %v657, 120
        %v764 = vpop.permute.xlu0 %763
        %v767 = vsel %vm659, %v761, 0
        %769 = vmatpush.msra.mxu0 0.0
        %770 = vmatpush.msra.mxu0 0.0
        %771 = vmatpush.msra.mxu0 0.0
        %772 = vmatpush.msra.mxu0 0.0
        %773 = vmatpush.msra.mxu0 0.0
        %774 = vmatpush.msra.mxu0 0.0
        %775 = vmatpush.msra.mxu0 0.0
        %776 = vmatpush.msra.mxu0 0.0
        %777 = vmatpush.msra.mxu0 0.0
        %778 = vmatpush.msra.mxu0 0.0
        %779 = vmatpush.msra.mxu0 0.0
        %780 = vmatpush.msra.mxu0 0.0
        %781 = vmatpush.msra.mxu0 0.0
        %782 = vmatpush.msra.mxu0 0.0
        %783 = vmatpush.msra.mxu0 0.0
        %784 = vmatpush.msra.mxu0 %v764
        %785 = vmatmul.f32.gmra.mxu0 %v767
        %v786 = vpop.f32.mrf.mxu0
        %v787 = vadd.f32 0.0, %v786
        %788 = vdwg.mxu0
        %790 = vrot.lane.b32.xlu0 %v787, 8
        %v791 = vpop.permute.xlu0 %790
        %vm793 = vcmask 130112
        %794 = vst.msk [vmem:[#allocation2] sm:$0xff] %vm793, %v791
        %795 = vrot.lane.b32.xlu0 %v595, 112
        %v796 = vpop.permute.xlu0 %795
        %797 = vrot.lane.b32.xlu0 %v626, 112
        %v798 = vpop.permute.xlu0 %797
        %v799 = vsel %vm659, %v796, 0
        %v801 = vsel %vm659, %v798, 0
        %803 = vmatpush.xpose.msra.mxu0 0.0
        %804 = vmatpush.xpose.msra.mxu0 0.0
        %805 = vmatpush.xpose.msra.mxu0 0.0
        %806 = vmatpush.xpose.msra.mxu0 0.0
        %807 = vmatpush.xpose.msra.mxu0 0.0
        %808 = vmatpush.xpose.msra.mxu0 0.0
        %809 = vmatpush.xpose.msra.mxu0 0.0
        %810 = vmatpush.xpose.msra.mxu0 0.0
        %811 = vmatpush.xpose.msra.mxu0 0.0
        %812 = vmatpush.xpose.msra.mxu0 0.0
        %813 = vmatpush.xpose.msra.mxu0 0.0
        %814 = vmatpush.xpose.msra.mxu0 0.0
        %815 = vmatpush.xpose.msra.mxu0 0.0
        %816 = vmatpush.xpose.msra.mxu0 0.0
        %817 = vmatpush.xpose.msra.mxu0 0.0
        %818 = vmatpush.xpose.msra.mxu0 %v801
        %819 = vmatmul.f32.gmra.mxu0 %v799
        %v820 = vpop.f32.mrf.mxu0
        %v821 = vadd.f32 0.0, %v820
        %822 = vdwg.mxu0
        %v823 = vmul.f32 %v821, 0.35355338
        %v824 = vsel %vm659, %v823, -inf
        %825 = vmax.xlane.f32.xlu0 %v824
        %v826 = vpop.xlane.xlu0 %825
        %v827 = vsub.f32 %v823, %v826
        %v828 = vmul.f32 %v827, 1.442695
        %v829 = vpow.pop %v828
        %v830 = vsel %vm659, %v829, 0.0
        %831 = vadd.xlane.f32.xlu0 %v830
        %v832 = vpop.xlane.xlu0 %831
        %v833 = vrcp.pop %v832
        %v834 = vmul.f32 %v829, %v833
        %835 = vrot.lane.b32.xlu0 %v657, 112
        %v836 = vpop.permute.xlu0 %835
        %v839 = vsel %vm659, %v834, 0
        %841 = vmatpush.msra.mxu0 0.0
        %842 = vmatpush.msra.mxu0 0.0
        %843 = vmatpush.msra.mxu0 0.0
        %844 = vmatpush.msra.mxu0 0.0
        %845 = vmatpush.msra.mxu0 0.0
        %846 = vmatpush.msra.mxu0 0.0
        %847 = vmatpush.msra.mxu0 0.0
        %848 = vmatpush.msra.mxu0 0.0
        %849 = vmatpush.msra.mxu0 0.0
        %850 = vmatpush.msra.mxu0 0.0
        %851 = vmatpush.msra.mxu0 0.0
        %852 = vmatpush.msra.mxu0 0.0
        %853 = vmatpush.msra.mxu0 0.0
        %854 = vmatpush.msra.mxu0 0.0
        %855 = vmatpush.msra.mxu0 0.0
        %856 = vmatpush.msra.mxu0 %v836
        %857 = vmatmul.f32.gmra.mxu0 %v839
        %v858 = vpop.f32.mrf.mxu0
        %v859 = vadd.f32 0.0, %v858
        %860 = vdwg.mxu0
        %862 = vrot.lane.b32.xlu0 %v859, 16
        %v863 = vpop.permute.xlu0 %862
        %vm865 = vcmask 195712
        %866 = vst.msk [vmem:[#allocation2] sm:$0xff] %vm865, %v863
        %867 = vrot.lane.b32.xlu0 %v595, 104
        %v868 = vpop.permute.xlu0 %867
        %869 = vrot.lane.b32.xlu0 %v626, 104
        %v870 = vpop.permute.xlu0 %869
        %v871 = vsel %vm659, %v868, 0
        %v873 = vsel %vm659, %v870, 0
        %875 = vmatpush.xpose.msra.mxu0 0.0
        %876 = vmatpush.xpose.msra.mxu0 0.0
        %877 = vmatpush.xpose.msra.mxu0 0.0
        %878 = vmatpush.xpose.msra.mxu0 0.0
        %879 = vmatpush.xpose.msra.mxu0 0.0
        %880 = vmatpush.xpose.msra.mxu0 0.0
        %881 = vmatpush.xpose.msra.mxu0 0.0
        %882 = vmatpush.xpose.msra.mxu0 0.0
        %883 = vmatpush.xpose.msra.mxu0 0.0
        %884 = vmatpush.xpose.msra.mxu0 0.0
        %885 = vmatpush.xpose.msra.mxu0 0.0
        %886 = vmatpush.xpose.msra.mxu0 0.0
        %887 = vmatpush.xpose.msra.mxu0 0.0
        %888 = vmatpush.xpose.msra.mxu0 0.0
        %889 = vmatpush.xpose.msra.mxu0 0.0
        %890 = vmatpush.xpose.msra.mxu0 %v873
        %891 = vmatmul.f32.gmra.mxu0 %v871
        %v892 = vpop.f32.mrf.mxu0
        %v893 = vadd.f32 0.0, %v892
        %894 = vdwg.mxu0
        %v895 = vmul.f32 %v893, 0.35355338
        %v896 = vsel %vm659, %v895, -inf
        %897 = vmax.xlane.f32.xlu0 %v896
        %v898 = vpop.xlane.xlu0 %897
        %v899 = vsub.f32 %v895, %v898
        %v900 = vmul.f32 %v899, 1.442695
        %v901 = vpow.pop %v900
        %v902 = vsel %vm659, %v901, 0.0
        %903 = vadd.xlane.f32.xlu0 %v902
        %v904 = vpop.xlane.xlu0 %903
        %v905 = vrcp.pop %v904
        %v906 = vmul.f32 %v901, %v905
        %907 = vrot.lane.b32.xlu0 %v657, 104
        %v908 = vpop.permute.xlu0 %907
        %v911 = vsel %vm659, %v906, 0
        %913 = vmatpush.msra.mxu0 0.0
        %914 = vmatpush.msra.mxu0 0.0
        %915 = vmatpush.msra.mxu0 0.0
        %916 = vmatpush.msra.mxu0 0.0
        %917 = vmatpush.msra.mxu0 0.0
        %918 = vmatpush.msra.mxu0 0.0
        %919 = vmatpush.msra.mxu0 0.0
        %920 = vmatpush.msra.mxu0 0.0
        %921 = vmatpush.msra.mxu0 0.0
        %922 = vmatpush.msra.mxu0 0.0
        %923 = vmatpush.msra.mxu0 0.0
        %924 = vmatpush.msra.mxu0 0.0
        %925 = vmatpush.msra.mxu0 0.0
        %926 = vmatpush.msra.mxu0 0.0
        %927 = vmatpush.msra.mxu0 0.0
        %928 = vmatpush.msra.mxu0 %v908
        %929 = vmatmul.f32.gmra.mxu0 %v911
        %v930 = vpop.f32.mrf.mxu0
        %v931 = vadd.f32 0.0, %v930
        %932 = vdwg.mxu0
        %934 = vrot.lane.b32.xlu0 %v931, 24
        %v935 = vpop.permute.xlu0 %934
        %vm937 = vcmask 261312
        %938 = vst.msk [vmem:[#allocation2] sm:$0xff] %vm937, %v935
        %v939 = vld [vmem:[#allocation2] sm:$0xff]
        %v940 = vld [vmem:[#allocation14] sm:$0xff]
        %v941 = vld [vmem:[#allocation14 + $0x8] sm:$0xff]
        %v942 = vld [vmem:[#allocation14 + $0x10] sm:$0xff]
        %v943 = vld [vmem:[#allocation14 + $0x18] sm:$0xff]
        %v944 = vld [vmem:[%s10] sm:$0x1]
        %v946 = vperm.slane %v944, 0
        %v949 = vsel %vm573, %v939, 0
        %951 = vmatpush.msra.mxu0 0.0
        %952 = vmatpush.msra.mxu0 0.0
        %953 = vmatpush.msra.mxu0 0.0
        %954 = vmatpush.msra.mxu0 0.0
        %955 = vmatpush.msra.mxu0 0.0
        %956 = vmatpush.msra.mxu0 0.0
        %957 = vmatpush.msra.mxu0 0.0
        %958 = vmatpush.msra.mxu0 0.0
        %959 = vmatpush.msra.mxu0 0.0
        %960 = vmatpush.msra.mxu0 0.0
        %961 = vmatpush.msra.mxu0 0.0
        %962 = vmatpush.msra.mxu0 0.0
        %963 = vmatpush.msra.mxu0 %v943
        %964 = vmatpush.msra.mxu0 %v942
        %965 = vmatpush.msra.mxu0 %v941
        %966 = vmatpush.msra.mxu0 %v940
        %967 = vmatmul.f32.gmra.mxu0 %v949
        %v968 = vpop.f32.mrf.mxu0
        %v969 = vadd.f32 %v946, %v968
        %970 = vdwg.mxu0
        %971 = vst.msk [vmem:[%s561] sm:$0xff] %vm573, %v969
        %s972 = sand.u32 %s303, 1
        %s973 = scalar_lea.sflag [#allocation5], %s972
        %s974 = sand.u32 %s303, 1
        %s975 = smul.addr %s974, 8
        %s976 = scalar_lea.vmem [#allocation15], %s975
        // Predicated region
        $region93: #{tpu_custom_call.1} parent=63 // pred_check
          %p977 = pneg %p313
        $region94: #{tpu_custom_call.1} parent=63 // pred_check_branch
          %979 = sbr.rel (%p977) target = $region96
        $region95: #{tpu_custom_call.1} parent=63 // pred_region
          %981 = vsyncadd %s973, 0
          %s982 = sadd.s32 %s38, %s37
          %s983 = smul.addr %s982, 8
          %s984 = scalar_lea.hbm %s11, %s983
          %s986 = sshll.u32 %s976, 4
          %s987 = int_to_ptr.vmem [resolvable:$true] %s986
          %s988 = sshll.u32 %s984, 4
          %s989 = int_to_ptr.hbm [resolvable:$true] %s988
          %991 = dma.vmem_to_hbm [thread:$0]  %s987, 128, %s989, %s973
        $region96: #{tpu_custom_call.1} parent=63 // pred_fallthru
          _
      $region64: #{tpu_custom_call.1} parent=5 // pred_fallthru
        _
      %p992 = scmp.le.s32.totalorder 2, %s28
      // Predicated region
      $region97: #{tpu_custom_call.1} parent=5 // pred_check
        %p993 = pneg %p992
      $region98: #{tpu_custom_call.1} parent=5 // pred_check_branch
        %995 = sbr.rel (%p993) target = $region100
      $region99: #{tpu_custom_call.1} parent=5 // pred_region
        %s996 = ssub.s32 %s28, 2
        // Predicated region
        $region101: #{tpu_custom_call.1} parent=99 // pred_check
          %p997 = pneg %p319
        $region102: #{tpu_custom_call.1} parent=99 // pred_check_branch
          %999 = sbr.rel (%p997) target = $region104
        $region103: #{tpu_custom_call.1} parent=99 // pred_region
          %s1000 = sand.u32 %s304, 1
          %s1001 = scalar_lea.sflag [#allocation5], %s1000
          %s1002 = sand.u32 %s304, 1
          %s1003 = smul.addr %s1002, 8
          %s1004 = scalar_lea.vmem [#allocation15], %s1003
          %1006 = dma.done %s1001, 128
        $region104: #{tpu_custom_call.1} parent=99 // pred_fallthru
          _
      $region100: #{tpu_custom_call.1} parent=5 // pred_fallthru
        _
    $region6: #{tpu_custom_call.1} parent=1 // loop_footer
      %s32 = sadd.s32 1, %s28
    $region7: #{tpu_custom_call.1} parent=1 // loop_footer_branch
      %27 = sbr.rel target = $region3
    $region8: #{tpu_custom_call.1} parent=1 // loop_exit
      _
    %1007 = vsyncpa [#allocation4], 1
    %s1008 = scalar_lea.sflag [#allocation4], 1
    %1009 = vsyncpa %s1008, 1
    %1010 = vsyncpa [#allocation7], 1
    %s1011 = scalar_lea.sflag [#allocation7], 1
    %1012 = vsyncpa %s1011, 1
    %1013 = vsyncpa [#allocation10], 1
    %1014 = vsyncpa [#allocation13], 1
    %1015 = vsyncpa [#allocation5], 1
    %s1016 = scalar_lea.sflag [#allocation5], 1
    %1017 = vsyncpa %s1016, 1

</llo_original>
